<compile_context>
chip_gen: v7x
topology: tpu7x:2x2x1
jax: 0.10.0
libtpu: 0.0.40
codegen_flags: <defaults>
</compile_context>

<pallas_src>
import functools
import math

import jax
import jax.numpy as jnp
from jax.experimental import pallas as pl
from jax.experimental.pallas import tpu as pltpu


def _proj_head_kernel(x_ref, w1_ref, b1_ref, w2_ref, b2_ref, out_ref):
    # First linear + ReLU. MXU accumulates in f32 regardless of input dtype.
    h = jnp.dot(x_ref[...], w1_ref[...], preferred_element_type=jnp.float32)
    h = jnp.maximum(h + b1_ref[...], 0.0)          # (TB, H) + (1, H), f32 VPU
    # Second linear. Cast the LHS to the weight dtype so bf16 weights take the
    # bf16 MXU input path; accumulation stays f32.
    o = jnp.dot(h.astype(w2_ref.dtype), w2_ref[...],
                preferred_element_type=jnp.float32)
    out_ref[...] = (o + b2_ref[...]).astype(out_ref.dtype)


def _cost_estimate(B, F, H, D, dtype):
    itemsize = jnp.dtype(dtype).itemsize
    return pl.CostEstimate(
        flops=2 * B * (F * H + H * D),
        transcendentals=0,
        bytes_accessed=(B * F + B * D) * itemsize + (F * H + H + H * D + D) * 4,
    )


@functools.partial(jax.jit, static_argnames=("block_b",))
def proj_head_forward(feat, w1, b1, w2, b2, *, block_b=16384):
    """feat: (B, feat_dim); w1: (feat_dim, hidden); b1: (hidden,);
    w2: (hidden, head_dim); b2: (head_dim,). Returns (B, head_dim).

    Output dtype follows feat.dtype (explicit caller contract: feeding bf16
    feat yields a bf16-rounded head output).  On v6e/v7x, cast feat (and
    optionally w1/w2) to bf16 before calling to halve the dominant HBM traffic;
    accumulation stays f32 inside the kernel.
    """
    B, F = feat.shape
    H = w1.shape[1]
    D = w2.shape[1]
    b1_2d = b1.reshape(1, H)
    b2_2d = b2.reshape(1, D)
    out_dtype = feat.dtype

    if B <= block_b:
        # Whole problem fits in one VMEM tile: straight-line kernel, no grid.
        # Wall time here is dominated by launch overhead; CostEstimate keeps
        # XLA from scheduling around it as if it were heavy.
        return pl.pallas_call(
            _proj_head_kernel,
            out_shape=jax.ShapeDtypeStruct((B, D), out_dtype),
            in_specs=[pl.BlockSpec(memory_space=pltpu.MemorySpace.VMEM)] * 5,
            out_specs=pl.BlockSpec(memory_space=pltpu.MemorySpace.VMEM),
            cost_estimate=_cost_estimate(B, F, H, D, feat.dtype),
        )(feat, w1, b1_2d, w2, b2_2d)

    # ---- Batch-tiled, pipelined path for large B ----------------------------
    # No wrapper pad/slice: ragged last block is handled by Pallas (OOB reads
    # padded, OOB writes dropped).  Garbage tail rows compute ReLU(b1)@w2+b2
    # independently per row and are discarded at store time.
    tb = block_b
    n_blocks = pl.cdiv(B, tb)

    out = pl.pallas_call(
        _proj_head_kernel,
        out_shape=jax.ShapeDtypeStruct((B, D), out_dtype),
        grid_spec=pltpu.PrefetchScalarGridSpec(
            num_scalar_prefetch=0,
            grid=(n_blocks,),
            in_specs=[
                pl.BlockSpec((tb, F), lambda i: (i, 0)),   # streamed per step
                pl.BlockSpec((F, H), lambda i: (0, 0)),    # VMEM-resident
                pl.BlockSpec((1, H), lambda i: (0, 0)),    # VMEM-resident
                pl.BlockSpec((H, D), lambda i: (0, 0)),    # VMEM-resident
                pl.BlockSpec((1, D), lambda i: (0, 0)),    # VMEM-resident
            ],
            out_specs=pl.BlockSpec((tb, D), lambda i: (i, 0)),
        ),
        compiler_params=pltpu.CompilerParams(
            # Batch steps are independent -> shard across v7x's 2 TensorCores.
            dimension_semantics=("parallel",),
        ),
        cost_estimate=_cost_estimate(B, F, H, D, feat.dtype),
    )(feat, w1, b1_2d, w2, b2_2d)
    return out


def _init_linear(key, in_dim, out_dim, dtype=jnp.float32):
    """Deterministic PyTorch-style Linear init: U(-1/sqrt(in), 1/sqrt(in)).
    Returns weight pre-transposed to (in_dim, out_dim) plus bias (out_dim,)."""
    kw, kb = jax.random.split(key)
    bound = 1.0 / math.sqrt(in_dim)
    w = jax.random.uniform(kw, (in_dim, out_dim), dtype, minval=-bound, maxval=bound)
    b = jax.random.uniform(kb, (out_dim,), dtype, minval=-bound, maxval=bound)
    return w, b


if __name__ == "__main__":
    # Small shapes consistent with the module's forward.
    batch, feat_dim, hidden_dim, head_dim = 8, 32, 64, 8

    root = jax.random.PRNGKey(0)
    k_feat, k_l1, k_l2, k_big = jax.random.split(root, 4)

    feat = jax.random.normal(k_feat, (batch, feat_dim), jnp.float32)
    w1, b1 = _init_linear(k_l1, feat_dim, hidden_dim)
    w2, b2 = _init_linear(k_l2, hidden_dim, head_dim)

    # Path 1: small batch -> grid-less single-tile kernel.
    out = proj_head_forward(feat, w1, b1, w2, b2)
    out = jax.block_until_ready(out)
    ref = jnp.maximum(feat @ w1 + b1, 0.0) @ w2 + b2
    assert out.shape == (batch, head_dim)
    assert jnp.allclose(out, ref, atol=1e-5, rtol=1e-5)

    # Path 2: larger batch (non-multiple of tile) -> batch-tiled parallel grid
    # with VMEM-resident weights and a ragged last block (no pad/slice copies).
    # block_b=256 here only to exercise the ragged-grid path at test scale;
    # production default is 16384.
    big_b = 1000
    feat_big = jax.random.normal(k_big, (big_b, feat_dim), jnp.float32)
    out_big = proj_head_forward(feat_big, w1, b1, w2, b2, block_b=256)
    out_big = jax.block_until_ready(out_big)
    ref_big = jnp.maximum(feat_big @ w1 + b1, 0.0) @ w2 + b2
    assert out_big.shape == (big_b, head_dim)
    assert jnp.allclose(out_big, ref_big, atol=1e-5, rtol=1e-5)

    print("KERNEL_OK")
</pallas_src>

<mosaic_0001>
module attributes {stable_mosaic.version = 11 : i64} {
  func.func @_proj_head_kernel(%arg0: memref<8x32xf32, #tpu.memory_space<vmem>>, %arg1: memref<32x64xf32, #tpu.memory_space<vmem>>, %arg2: memref<1x64xf32, #tpu.memory_space<vmem>>, %arg3: memref<64x8xf32, #tpu.memory_space<vmem>>, %arg4: memref<1x8xf32, #tpu.memory_space<vmem>>, %arg5: memref<8x8xf32, #tpu.memory_space<vmem>>) attributes {dimension_semantics = [], scalar_prefetch = 0 : i64, scratch_operands = 0 : i64, tpu.core_type = #tpu.core_type<tc>} {
    %c0 = arith.constant 0 : index
    %c0_0 = arith.constant 0 : index
    %0 = vector.load %arg0[%c0, %c0_0] : memref<8x32xf32, #tpu.memory_space<vmem>>, vector<8x32xf32>
    %c0_1 = arith.constant 0 : index
    %c0_2 = arith.constant 0 : index
    %1 = vector.load %arg1[%c0_1, %c0_2] : memref<32x64xf32, #tpu.memory_space<vmem>>, vector<32x64xf32>
    %cst = arith.constant dense<0.000000e+00> : vector<8x64xf32>
    %2 = tpu.matmul %0, %1, %cst {dimension_numbers = #tpu.dot_dimension_numbers<[1], [0], [0], [1], [0, 0, 1, 1], [], []>} : vector<8x32xf32>, vector<32x64xf32>, vector<8x64xf32> -> vector<8x64xf32>
    %c0_3 = arith.constant 0 : index
    %c0_4 = arith.constant 0 : index
    %3 = vector.load %arg2[%c0_3, %c0_4] : memref<1x64xf32, #tpu.memory_space<vmem>>, vector<1x64xf32>
    %4 = vector.broadcast %3 : vector<1x64xf32> to vector<8x64xf32>
    %5 = arith.addf %2, %4 : vector<8x64xf32>
    %cst_5 = arith.constant 0.000000e+00 : f32
    %6 = vector.broadcast %cst_5 : f32 to vector<8x64xf32>
    %7 = arith.maximumf %5, %6 : vector<8x64xf32>
    %c0_6 = arith.constant 0 : index
    %c0_7 = arith.constant 0 : index
    %8 = vector.load %arg3[%c0_6, %c0_7] : memref<64x8xf32, #tpu.memory_space<vmem>>, vector<64x8xf32>
    %cst_8 = arith.constant dense<0.000000e+00> : vector<8x8xf32>
    %9 = tpu.matmul %7, %8, %cst_8 {dimension_numbers = #tpu.dot_dimension_numbers<[1], [0], [0], [1], [0, 0, 1, 1], [], []>} : vector<8x64xf32>, vector<64x8xf32>, vector<8x8xf32> -> vector<8x8xf32>
    %c0_9 = arith.constant 0 : index
    %c0_10 = arith.constant 0 : index
    %10 = vector.load %arg4[%c0_9, %c0_10] : memref<1x8xf32, #tpu.memory_space<vmem>>, vector<1x8xf32>
    %11 = vector.broadcast %10 : vector<1x8xf32> to vector<8x8xf32>
    %12 = arith.addf %9, %11 : vector<8x8xf32>
    %c0_11 = arith.constant 0 : index
    %c0_12 = arith.constant 0 : index
    %13 = vector.load %arg5[%c0_11, %c0_12] : memref<8x8xf32, #tpu.memory_space<vmem>>, vector<8x8xf32>
    tpu.vector_store %arg5[%c0_11, %c0_12], %12 {strides = array<i32>} : memref<8x8xf32, #tpu.memory_space<vmem>>, vector<8x8xf32>,
    return
  }
}

</mosaic_0001>

<llo_original>
// kernel: proj_head_forward.1
$region0: #{proj_head_forward.1}
  #allocation0 [shape = 'u32[]', space=smem, size = 0x4, offset = 0x4, fixed_abs, tag = 'smem constant byte address 0x4 - core index']
  #allocation1 [shape = 'u32[144,128]{1,0:T(1,128)}', space=vmem, size = 0x12000, scoped, tag = 'internal scratch']
  %s0 = inlined_call_operand.vmem [shape: f32[8,32], index: 0, kind: input, shape index: {}]
  %s1 = inlined_call_operand.vmem [shape: f32[32,64], index: 1, kind: input, shape index: {}]
  %s2 = inlined_call_operand.vmem [shape: f32[1,64], index: 2, kind: input, shape index: {}]
  %s3 = inlined_call_operand.vmem [shape: f32[64,8], index: 3, kind: input, shape index: {}]
  %s4 = inlined_call_operand.vmem [shape: f32[1,8], index: 4, kind: input, shape index: {}]
  %s5 = inlined_call_operand.hbm [shape: f32[8,8], index: 5, kind: output, shape index: {}]
  %s6 = sld [smem:[#allocation0]]
  $region30: #{proj_head_forward.1} parent=0
    _
  %s8 = ssub.s32 1, %s6
  %s9 = scalar_select 0, %s8, %s6
  $region1: #{proj_head_forward.1} parent=0
    #allocation2 [shape = 'u8[4096]{0}', space=vmem, size = 0x1000, scoped, tag = 'output window, operand 0, single buffered']
    #allocation3 [shape = 's32[1]{0}', space=sflag, size = 0x4, scoped, tag = 'scoped memory for proj_head_forward.1']
    %10 = vsyncpa [#allocation3], 0
    // Predicated region
    $region2: #{proj_head_forward.1} parent=1 // pred_check
      _
    $region3: #{proj_head_forward.1} parent=1 // pred_check_branch
      %12 = sbr.rel (0) target = $region5
    $region4: #{proj_head_forward.1} parent=1 // pred_region
      _
    $region5: #{proj_head_forward.1} parent=1 // pred_fallthru
      _
    // Predicated region
    $region6: #{proj_head_forward.1} parent=1 // pred_check
      _
    $region7: #{proj_head_forward.1} parent=1 // pred_check_branch
      %14 = sbr.rel (0) target = $region9
    $region8: #{proj_head_forward.1} parent=1 // pred_region
      _
    $region9: #{proj_head_forward.1} parent=1 // pred_fallthru
      _
    // Predicated region
    $region10: #{proj_head_forward.1} parent=1 // pred_check
      _
    $region11: #{proj_head_forward.1} parent=1 // pred_check_branch
      %16 = sbr.rel (0) target = $region13
    $region12: #{proj_head_forward.1} parent=1 // pred_region
      _
    $region13: #{proj_head_forward.1} parent=1 // pred_fallthru
      _
    // Predicated region
    $region14: #{proj_head_forward.1} parent=1 // pred_check
      _
    $region15: #{proj_head_forward.1} parent=1 // pred_check_branch
      %18 = sbr.rel (0) target = $region17
    $region16: #{proj_head_forward.1} parent=1 // pred_region
      _
    $region17: #{proj_head_forward.1} parent=1 // pred_fallthru
      _
    // Predicated region
    $region18: #{proj_head_forward.1} parent=1 // pred_check
      _
    $region19: #{proj_head_forward.1} parent=1 // pred_check_branch
      %20 = sbr.rel (0) target = $region21
    $region20: #{proj_head_forward.1} parent=1 // pred_region
      _
    $region21: #{proj_head_forward.1} parent=1 // pred_fallthru
      _
    %v21 = vld [vmem:[%s0] sm:$0xff]
    %v22 = vld [vmem:[%s1] sm:$0xff]
    %v23 = vld [vmem:[%s1 + $0x8] sm:$0xff]
    %v24 = vld [vmem:[%s1 + $0x10] sm:$0xff]
    %v25 = vld [vmem:[%s1 + $0x18] sm:$0xff]
    %v26 = vld [vmem:[%s2] sm:$0x1]
    %v28 = vlaneseq
    %v29 = vshrl.u32 %v28, 7
    %v30 = vsub.s32 0, %v29
    %v31 = vrot.slane %v26, %v30
    %vm33 = vcmask 261120
    %v35 = vsel %vm33, %v21, 0
    %37 = vmatprep.subr.mxu0 0.0
    %38 = vmatpush1.msra.mxu0 %v22
    %39 = vmatprep.subr.mxu0 0.0
    %40 = vmatpush1.msra.mxu0 %v23
    %41 = vmatprep.subr.mxu0 0.0
    %42 = vmatpush1.msra.mxu0 %v24
    %43 = vmatprep.subr.mxu0 0.0
    %44 = vmatpush1.msra.mxu0 %v25
    %45 = vmatprep.subr.mxu0 0.0
    %46 = vmatpush1.msra.mxu0 0.0
    %47 = vmatprep.subr.mxu0 0.0
    %48 = vmatpush1.msra.mxu0 0.0
    %49 = vmatprep.subr.mxu0 0.0
    %50 = vmatpush1.msra.mxu0 0.0
    %51 = vmatprep.subr.mxu0 0.0
    %52 = vmatpush1.msra.mxu0 0.0
    %53 = vmatprep.subr.mxu0 0.0
    %54 = vmatpush1.msra.mxu0 0.0
    %55 = vmatprep.subr.mxu0 0.0
    %56 = vmatpush1.msra.mxu0 0.0
    %57 = vmatprep.subr.mxu0 0.0
    %58 = vmatpush1.msra.mxu0 0.0
    %59 = vmatprep.subr.mxu0 0.0
    %60 = vmatpush1.msra.mxu0 0.0
    %61 = vmatprep.subr.mxu0 0.0
    %62 = vmatpush1.msra.mxu0 0.0
    %63 = vmatprep.subr.mxu0 0.0
    %64 = vmatpush1.msra.mxu0 0.0
    %65 = vmatprep.subr.mxu0 0.0
    %66 = vmatpush1.msra.mxu0 0.0
    %67 = vmatprep.subr.mxu0 0.0
    %68 = vmatpush1.msra.mxu0 0.0
    %69 = vmatprep.subr.mxu0 0.0
    %70 = vmatpush1.msra.mxu0 0.0
    %71 = vmatprep.subr.mxu0 0.0
    %72 = vmatpush1.msra.mxu0 0.0
    %73 = vmatprep.subr.mxu0 0.0
    %74 = vmatpush1.msra.mxu0 0.0
    %75 = vmatprep.subr.mxu0 0.0
    %76 = vmatpush1.msra.mxu0 0.0
    %77 = vmatprep.subr.mxu0 0.0
    %78 = vmatpush1.msra.mxu0 0.0
    %79 = vmatprep.subr.mxu0 0.0
    %80 = vmatpush1.msra.mxu0 0.0
    %81 = vmatprep.subr.mxu0 0.0
    %82 = vmatpush1.msra.mxu0 0.0
    %83 = vmatprep.subr.mxu0 0.0
    %84 = vmatpush1.msra.mxu0 0.0
    %85 = vmatprep.subr.mxu0 0.0
    %86 = vmatpush1.msra.mxu0 0.0
    %87 = vmatprep.subr.mxu0 0.0
    %88 = vmatpush1.msra.mxu0 0.0
    %89 = vmatprep.subr.mxu0 0.0
    %90 = vmatpush1.msra.mxu0 0.0
    %91 = vmatprep.subr.mxu0 0.0
    %92 = vmatpush1.msra.mxu0 0.0
    %93 = vmatprep.subr.mxu0 0.0
    %94 = vmatpush1.msra.mxu0 0.0
    %95 = vmatprep.subr.mxu0 0.0
    %96 = vmatpush1.msra.mxu0 0.0
    %97 = vmatprep.subr.mxu0 0.0
    %98 = vmatpush1.msra.mxu0 0.0
    %99 = vmatprep.subr.mxu0 0.0
    %100 = vmatpush1.msra.mxu0 0.0
    %101 = vmatprep.mubr.f32.mxu0 0.0
    %102 = vmatmul.mubr.f32.gmra.mrb[0].mxu0 %v35
    %v103 = vpop.f32.mrb[0].mxu0
    %v104 = vadd.f32 %v31, %v103
    %v105 = vpop.f32.mrb[0].mxu0
    %106 = vdwg.mxu0
    %v107 = vmax.f32 %v104, 0.0
    %v108 = vld [vmem:[%s3] sm:$0xff]
    %v109 = vld [vmem:[%s3 + $0x8] sm:$0xff]
    %v110 = vld [vmem:[%s3 + $0x10] sm:$0xff]
    %v111 = vld [vmem:[%s3 + $0x18] sm:$0xff]
    %v112 = vld [vmem:[%s3 + $0x20] sm:$0xff]
    %v113 = vld [vmem:[%s3 + $0x28] sm:$0xff]
    %v114 = vld [vmem:[%s3 + $0x30] sm:$0xff]
    %v115 = vld [vmem:[%s3 + $0x38] sm:$0xff]
    %v116 = vld [vmem:[%s4] sm:$0x1]
    %v118 = vlaneseq
    %v119 = vshrl.u32 %v118, 7
    %v120 = vsub.s32 0, %v119
    %v121 = vrot.slane %v116, %v120
    %vm123 = vcmask 523264
    %v125 = vsel %vm123, %v107, 0
    %127 = vmatprep.subr.mxu0 0.0
    %128 = vmatpush1.msra.mxu0 %v108
    %129 = vmatprep.subr.mxu0 0.0
    %130 = vmatpush1.msra.mxu0 %v109
    %131 = vmatprep.subr.mxu0 0.0
    %132 = vmatpush1.msra.mxu0 %v110
    %133 = vmatprep.subr.mxu0 0.0
    %134 = vmatpush1.msra.mxu0 %v111
    %135 = vmatprep.subr.mxu0 0.0
    %136 = vmatpush1.msra.mxu0 %v112
    %137 = vmatprep.subr.mxu0 0.0
    %138 = vmatpush1.msra.mxu0 %v113
    %139 = vmatprep.subr.mxu0 0.0
    %140 = vmatpush1.msra.mxu0 %v114
    %141 = vmatprep.subr.mxu0 0.0
    %142 = vmatpush1.msra.mxu0 %v115
    %143 = vmatprep.subr.mxu0 0.0
    %144 = vmatpush1.msra.mxu0 0.0
    %145 = vmatprep.subr.mxu0 0.0
    %146 = vmatpush1.msra.mxu0 0.0
    %147 = vmatprep.subr.mxu0 0.0
    %148 = vmatpush1.msra.mxu0 0.0
    %149 = vmatprep.subr.mxu0 0.0
    %150 = vmatpush1.msra.mxu0 0.0
    %151 = vmatprep.subr.mxu0 0.0
    %152 = vmatpush1.msra.mxu0 0.0
    %153 = vmatprep.subr.mxu0 0.0
    %154 = vmatpush1.msra.mxu0 0.0
    %155 = vmatprep.subr.mxu0 0.0
    %156 = vmatpush1.msra.mxu0 0.0
    %157 = vmatprep.subr.mxu0 0.0
    %158 = vmatpush1.msra.mxu0 0.0
    %159 = vmatprep.subr.mxu0 0.0
    %160 = vmatpush1.msra.mxu0 0.0
    %161 = vmatprep.subr.mxu0 0.0
    %162 = vmatpush1.msra.mxu0 0.0
    %163 = vmatprep.subr.mxu0 0.0
    %164 = vmatpush1.msra.mxu0 0.0
    %165 = vmatprep.subr.mxu0 0.0
    %166 = vmatpush1.msra.mxu0 0.0
    %167 = vmatprep.subr.mxu0 0.0
    %168 = vmatpush1.msra.mxu0 0.0
    %169 = vmatprep.subr.mxu0 0.0
    %170 = vmatpush1.msra.mxu0 0.0
    %171 = vmatprep.subr.mxu0 0.0
    %172 = vmatpush1.msra.mxu0 0.0
    %173 = vmatprep.subr.mxu0 0.0
    %174 = vmatpush1.msra.mxu0 0.0
    %175 = vmatprep.subr.mxu0 0.0
    %176 = vmatpush1.msra.mxu0 0.0
    %177 = vmatprep.subr.mxu0 0.0
    %178 = vmatpush1.msra.mxu0 0.0
    %179 = vmatprep.subr.mxu0 0.0
    %180 = vmatpush1.msra.mxu0 0.0
    %181 = vmatprep.subr.mxu0 0.0
    %182 = vmatpush1.msra.mxu0 0.0
    %183 = vmatprep.subr.mxu0 0.0
    %184 = vmatpush1.msra.mxu0 0.0
    %185 = vmatprep.subr.mxu0 0.0
    %186 = vmatpush1.msra.mxu0 0.0
    %187 = vmatprep.subr.mxu0 0.0
    %188 = vmatpush1.msra.mxu0 0.0
    %189 = vmatprep.subr.mxu0 0.0
    %190 = vmatpush1.msra.mxu0 0.0
    %191 = vmatprep.mubr.f32.mxu0 0.0
    %192 = vmatmul.mubr.f32.gmra.mrb[0].mxu0 %v125
    %v193 = vpop.f32.mrb[0].mxu0
    %v194 = vadd.f32 %v121, %v193
    %v195 = vpop.f32.mrb[0].mxu0
    %196 = vdwg.mxu0
    %vm197 = vcmask 64512
    %198 = vst.msk [vmem:[#allocation2] sm:$0xff] %vm197, %v194
    // Predicated region
    $region22: #{proj_head_forward.1} parent=1 // pred_check
      _
    $region23: #{proj_head_forward.1} parent=1 // pred_check_branch
      %200 = sbr.rel (0) target = $region25
    $region24: #{proj_head_forward.1} parent=1 // pred_region
      %s202 = ssub.s32 128, 128
      %203 = vsyncadd [#allocation3], %s202
      %s205 = sshll.u32 [#allocation2], 4
      %s206 = int_to_ptr.vmem [resolvable:$true] %s205
      %208 = dma.vmem_to_hbm [thread:$0]  %s206, 128, %s5, [#allocation3]
    $region25: #{proj_head_forward.1} parent=1 // pred_fallthru
      _
    // Predicated region
    $region26: #{proj_head_forward.1} parent=1 // pred_check
      _
    $region27: #{proj_head_forward.1} parent=1 // pred_check_branch
      %210 = sbr.rel (0) target = $region29
    $region28: #{proj_head_forward.1} parent=1 // pred_region
      %211 = dma.done [#allocation3], 128
    $region29: #{proj_head_forward.1} parent=1 // pred_fallthru
      _
    %212 = vsyncpa [#allocation3], 1

</llo_original>
